<compile_context>
chip_gen: v6e
topology: v6e:2x2x1
jax: 0.10.0
libtpu: 0.0.40
codegen_flags: <defaults>
</compile_context>

<pallas_src>
import jax
import jax.numpy as jnp
from jax.experimental import pallas as pl
from jax.experimental.pallas import tpu as pltpu


def _round_up(a: int, b: int) -> int:
    return (a + b - 1) // b * b


def _qlinear_kernel(consts_ref, x_ref, qw_ref, b_ref, o_ref, acc_ref, xsum_ref):
    """One (tm, tn) output tile; grid axis 2 reduces over K.

    consts_ref (SMEM, f32[2]): [scale, scale * (zero_point - 128)]
    x_ref   : (tm, tk) bf16 activations
    qw_ref  : (tk, tn) int8  offset-quantized weights (q - 128), pre-transposed
    b_ref   : (1,  tn) f32   bias
    """
    k = pl.program_id(2)

    @pl.when(k == 0)
    def _():
        acc_ref[...] = jnp.zeros_like(acc_ref)
        xsum_ref[...] = jnp.zeros_like(xsum_ref)

    x = x_ref[...]                                    # (tm, tk) bf16
    w = qw_ref[...].astype(jnp.bfloat16)              # int8 -> bf16, exact values
    acc_ref[...] += jnp.dot(x, w, preferred_element_type=jnp.float32)
    # Row-sum of x for the zero-point correction term (XLU reduce; cheap filler
    # under an MXU-bound loop).
    xsum_ref[...] += jnp.sum(x.astype(jnp.float32), axis=-1, keepdims=True)

    @pl.when(k == pl.num_programs(2) - 1)
    def _():
        scale = consts_ref[0]                 # scale
        corr = consts_ref[1]                  # scale * (zero_point - 128)
        o_ref[...] = (scale * acc_ref[...]
                      - corr * xsum_ref[...]
                      + b_ref[...]).astype(o_ref.dtype)


def quantized_linear_forward(x, q_stored, scale, zero_point, bias,
                             *, tm=None, tn=None, tk=None):
    """Forward pass:  y = x @ ((q_stored + 128 - zero_point) * scale) + bias

    x:          (B, K) float
    q_stored:   (K, N) int8   -- quantized weights, transposed, offset by -128
    scale:      (1,)   float32
    zero_point: (1,)   float32
    bias:       (N,)   float32
    returns:    (B, N) float32
    """
    B, K = x.shape
    K2, N = q_stored.shape
    assert K == K2 and bias.shape == (N,)

    # --- tile selection ------------------------------------------------------
    if tm is None:
        tm = min(128, _round_up(B, 8))
    if tn is None:
        tn = 256 if (N % 256 == 0 and N >= 256) else 128
    if tk is None:
        if K % 1024 == 0 and K >= 1024:
            tk = 1024
        elif K % 512 == 0 and K >= 512:
            tk = 512
        elif K % 256 == 0 and K >= 256:
            tk = 256
        else:
            tk = 128

    Bp, Kp, Np = _round_up(B, tm), _round_up(K, tk), _round_up(N, tn)

    # --- dtype / padding prep (cheap relative to the matmul) -----------------
    xb = x.astype(jnp.bfloat16)
    if (Bp, Kp) != (B, K):
        xb = jnp.pad(xb, ((0, Bp - B), (0, Kp - K)))
    qw = q_stored
    if (Kp, Np) != (K, N):
        qw = jnp.pad(qw, ((0, Kp - K), (0, Np - N)))
    b2 = bias.astype(jnp.float32).reshape(1, N)
    if Np != N:
        b2 = jnp.pad(b2, ((0, 0), (0, Np - N)))

    # Scalars applied once in the epilogue: y = s*acc - c*rowsum(x) + bias
    consts = jnp.stack(
        [scale[0], scale[0] * (zero_point[0] - 128.0)]).astype(jnp.float32)

    grid = (Bp // tm, Np // tn, Kp // tk)

    out = pl.pallas_call(
        _qlinear_kernel,
        out_shape=jax.ShapeDtypeStruct((Bp, Np), jnp.float32),
        grid_spec=pltpu.PrefetchScalarGridSpec(
            num_scalar_prefetch=0,
            grid=grid,
            in_specs=[
                pl.BlockSpec(memory_space=pltpu.SMEM),           # consts (2,)
                pl.BlockSpec((tm, tk), lambda i, j, k: (i, k)),  # x tile (bf16)
                pl.BlockSpec((tk, tn), lambda i, j, k: (k, j)),  # int8 weight tile
                pl.BlockSpec((1, tn), lambda i, j, k: (0, j)),   # bias tile
            ],
            out_specs=pl.BlockSpec((tm, tn), lambda i, j, k: (i, j)),
            scratch_shapes=[
                pltpu.VMEM((tm, tn), jnp.float32),   # matmul accumulator
                pltpu.VMEM((tm, 1), jnp.float32),    # rowsum(x) accumulator
            ],
        ),
        compiler_params=pltpu.CompilerParams(
            dimension_semantics=("parallel", "parallel", "arbitrary"),
        ),
    )(consts, xb, qw, b2)

    return out[:B, :N]


def quantize_weights(weights, bits=8, symmetric=True):
    """Reproduces QuantizedLinear._quantize_weights exactly (in JAX) and
    prepares the int8 / pre-transposed storage used by the Pallas kernel.

    weights: (N, K) float32, nn.Linear layout (out_features, in_features).

    Returns:
      q_stored:   (K, N) int8  == clamp(round(w/scale + zp), 0, 2^bits-1) - 128
      scale, zero_point: (1,) float32 -- identical to the module's buffers.
    """
    assert bits <= 8, "int8 offset storage assumes bits <= 8"
    if symmetric:
        abs_max = jnp.max(jnp.abs(weights))
        scale = abs_max / (2 ** (bits - 1) - 1)
        zero_point = jnp.zeros_like(scale)
    else:
        min_val = jnp.min(weights)
        max_val = jnp.max(weights)
        scale = (max_val - min_val) / (2 ** bits - 1)
        zero_point = jnp.round(-min_val / scale)
    # NOTE: clamp to [0, 2^bits - 1] exactly like the PyTorch module (this
    # zeroes negative weights in the symmetric path -- reproduced on purpose,
    # matching the reference implementation's behaviour).
    q = jnp.clip(jnp.round(weights / scale + zero_point), 0.0, 2.0 ** bits - 1.0)
    # One-time storage transform: -128 offset (fits int8) + transpose to (K, N)
    # so the forward kernel never transposes or moves f32-width weights again.
    q_stored = (q - 128.0).astype(jnp.int8).T
    return q_stored, scale.reshape(1), zero_point.reshape(1)


if __name__ == "__main__":
    # Small shapes consistent with nn.Linear: batch=8, in_features=512, out=256.
    B, K, N = 8, 512, 256
    bits, symmetric = 8, True

    key = jax.random.PRNGKey(0)
    kx, kw, kb = jax.random.split(key, 3)
    x = jax.random.normal(kx, (B, K), dtype=jnp.float32)
    weight = jax.random.normal(kw, (N, K), dtype=jnp.float32) * 0.05   # (out, in)
    bias = jax.random.normal(kb, (N,), dtype=jnp.float32) * 0.1

    # __init__-time quantization (plain JAX glue; one-time cost).
    q_stored, scale, zero_point = quantize_weights(weight, bits=bits,
                                                   symmetric=symmetric)

    # Pallas forward.
    y = quantized_linear_forward(x, q_stored, scale, zero_point, bias)
    y = jax.block_until_ready(y)
    assert y.shape == (B, N)

    # Reference 1: exact PyTorch-module semantics in f32.
    q_f32 = q_stored.astype(jnp.float32).T + 128.0       # (N, K), values in [0, 255]
    w_deq = (q_f32 - zero_point[0]) * scale[0]
    y_ref = x @ w_deq.T + bias
    # Kernel feeds the MXU in bf16 (x cast once), so allow bf16-level error.
    assert jnp.allclose(y, y_ref, atol=3e-2, rtol=3e-2), "mismatch vs module ref"

    # Reference 2: same math & precision as the kernel (bf16 x, f32 accumulate).
    xb = x.astype(jnp.bfloat16).astype(jnp.float32)
    acc = xb @ q_stored.astype(jnp.float32)
    corr = scale[0] * (zero_point[0] - 128.0)
    y_ref2 = scale[0] * acc - corr * jnp.sum(xb, axis=-1, keepdims=True) + bias
    assert jnp.allclose(y, y_ref2, atol=2e-3, rtol=2e-3), \
        "mismatch vs precision-matched reference"

    print("KERNEL_OK")
</pallas_src>

<mosaic_0001>
module attributes {stable_mosaic.version = 11 : i64} {
  func.func @_qlinear_kernel(%arg0: i32, %arg1: i32, %arg2: i32, %arg3: memref<2xf32, #tpu.memory_space<smem>>, %arg4: memref<8x512xbf16, #tpu.memory_space<vmem>>, %arg5: memref<512x256xi8, #tpu.memory_space<vmem>>, %arg6: memref<1x256xf32, #tpu.memory_space<vmem>>, %arg7: memref<8x256xf32, #tpu.memory_space<vmem>>, %arg8: memref<8x256xf32, #tpu.memory_space<vmem>>, %arg9: memref<8x1xf32, #tpu.memory_space<vmem>>) attributes {dimension_semantics = [#tpu.dimension_semantics<parallel>, #tpu.dimension_semantics<parallel>, #tpu.dimension_semantics<arbitrary>], iteration_bounds = array<i64: 1, 1, 1>, scalar_prefetch = 0 : i64, scratch_operands = 2 : i64, tpu.core_type = #tpu.core_type<tc>, window_params = [{transform_indices = @transform_0, window_bounds = array<i64: 2>}, {transform_indices = @transform_1, window_bounds = array<i64: 8, 512>}, {transform_indices = @transform_2, window_bounds = array<i64: 512, 256>}, {transform_indices = @transform_3, window_bounds = array<i64: 1, 256>}, {transform_indices = @transform_4, window_bounds = array<i64: 8, 256>}]} {
    %c0_i32 = arith.constant 0 : i32
    %0 = arith.cmpi eq, %arg2, %c0_i32 : i32
    %1 = arith.extui %0 : i1 to i32
    %c0_i32_0 = arith.constant 0 : i32
    %2 = arith.cmpi ne, %1, %c0_i32_0 : i32
    scf.if %2 {
      %cst_15 = arith.constant 0.000000e+00 : f32
      %19 = vector.broadcast %cst_15 : f32 to vector<8x256xf32>
      %c0_16 = arith.constant 0 : index
      %c0_17 = arith.constant 0 : index
      %20 = vector.load %arg8[%c0_16, %c0_17] : memref<8x256xf32, #tpu.memory_space<vmem>>, vector<8x256xf32>
      tpu.vector_store %arg8[%c0_16, %c0_17], %19 {strides = array<i32>} : memref<8x256xf32, #tpu.memory_space<vmem>>, vector<8x256xf32>,
      %cst_18 = arith.constant 0.000000e+00 : f32
      %21 = vector.broadcast %cst_18 : f32 to vector<8x1xf32>
      %c0_19 = arith.constant 0 : index
      %c0_20 = arith.constant 0 : index
      %22 = vector.load %arg9[%c0_19, %c0_20] : memref<8x1xf32, #tpu.memory_space<vmem>>, vector<8x1xf32>
      tpu.vector_store %arg9[%c0_19, %c0_20], %21 {strides = array<i32>} : memref<8x1xf32, #tpu.memory_space<vmem>>, vector<8x1xf32>,
    } else {
    }
    %c0 = arith.constant 0 : index
    %c0_1 = arith.constant 0 : index
    %3 = vector.load %arg4[%c0, %c0_1] : memref<8x512xbf16, #tpu.memory_space<vmem>>, vector<8x512xbf16>
    %c0_2 = arith.constant 0 : index
    %c0_3 = arith.constant 0 : index
    %4 = vector.load %arg5[%c0_2, %c0_3] : memref<512x256xi8, #tpu.memory_space<vmem>>, vector<512x256xi8>
    %5 = arith.sitofp %4 : vector<512x256xi8> to vector<512x256xbf16>
    %c0_4 = arith.constant 0 : index
    %c0_5 = arith.constant 0 : index
    %6 = vector.load %arg8[%c0_4, %c0_5] : memref<8x256xf32, #tpu.memory_space<vmem>>, vector<8x256xf32>
    %cst = arith.constant dense<0.000000e+00> : vector<8x256xf32>
    %7 = tpu.matmul %3, %5, %cst {dimension_numbers = #tpu.dot_dimension_numbers<[1], [0], [0], [1], [0, 0, 1, 1], [], []>} : vector<8x512xbf16>, vector<512x256xbf16>, vector<8x256xf32> -> vector<8x256xf32>
    %8 = arith.addf %6, %7 : vector<8x256xf32>
    %c0_6 = arith.constant 0 : index
    %c0_7 = arith.constant 0 : index
    %9 = vector.load %arg8[%c0_6, %c0_7] : memref<8x256xf32, #tpu.memory_space<vmem>>, vector<8x256xf32>
    tpu.vector_store %arg8[%c0_6, %c0_7], %8 {strides = array<i32>} : memref<8x256xf32, #tpu.memory_space<vmem>>, vector<8x256xf32>,
    %c0_8 = arith.constant 0 : index
    %c0_9 = arith.constant 0 : index
    %10 = vector.load %arg9[%c0_8, %c0_9] : memref<8x1xf32, #tpu.memory_space<vmem>>, vector<8x1xf32>
    %11 = arith.extf %3 : vector<8x512xbf16> to vector<8x512xf32>
    %cst_10 = arith.constant dense<0.000000e+00> : vector<8xf32>
    %12 = vector.multi_reduction <add>, %11, %cst_10 [1] : vector<8x512xf32> to vector<8xf32>
    %13 = vector.shape_cast %12 : vector<8xf32> to vector<8x1xf32>
    %14 = arith.addf %10, %13 : vector<8x1xf32>
    %c0_11 = arith.constant 0 : index
    %c0_12 = arith.constant 0 : index
    %15 = vector.load %arg9[%c0_11, %c0_12] : memref<8x1xf32, #tpu.memory_space<vmem>>, vector<8x1xf32>
    tpu.vector_store %arg9[%c0_11, %c0_12], %14 {strides = array<i32>} : memref<8x1xf32, #tpu.memory_space<vmem>>, vector<8x1xf32>,
    %c0_i32_13 = arith.constant 0 : i32
    %16 = arith.cmpi eq, %arg2, %c0_i32_13 : i32
    %17 = arith.extui %16 : i1 to i32
    %c0_i32_14 = arith.constant 0 : i32
    %18 = arith.cmpi ne, %17, %c0_i32_14 : i32
    scf.if %18 {
      %c0_15 = arith.constant 0 : index
      %19 = memref.load %arg3[%c0_15] : memref<2xf32, #tpu.memory_space<smem>>
      %c1 = arith.constant 1 : index
      %20 = memref.load %arg3[%c1] : memref<2xf32, #tpu.memory_space<smem>>
      %c0_16 = arith.constant 0 : index
      %c0_17 = arith.constant 0 : index
      %21 = vector.load %arg8[%c0_16, %c0_17] : memref<8x256xf32, #tpu.memory_space<vmem>>, vector<8x256xf32>
      %22 = vector.broadcast %19 : f32 to vector<8x256xf32>
      %23 = arith.mulf %22, %21 : vector<8x256xf32>
      %c0_18 = arith.constant 0 : index
      %c0_19 = arith.constant 0 : index
      %24 = vector.load %arg9[%c0_18, %c0_19] : memref<8x1xf32, #tpu.memory_space<vmem>>, vector<8x1xf32>
      %25 = vector.broadcast %20 : f32 to vector<8x1xf32>
      %26 = arith.mulf %25, %24 : vector<8x1xf32>
      %27 = vector.broadcast %26 : vector<8x1xf32> to vector<8x256xf32>
      %28 = arith.subf %23, %27 : vector<8x256xf32>
      %c0_20 = arith.constant 0 : index
      %c0_21 = arith.constant 0 : index
      %29 = vector.load %arg6[%c0_20, %c0_21] : memref<1x256xf32, #tpu.memory_space<vmem>>, vector<1x256xf32>
      %30 = vector.broadcast %29 : vector<1x256xf32> to vector<8x256xf32>
      %31 = arith.addf %28, %30 : vector<8x256xf32>
      %c0_22 = arith.constant 0 : index
      %c0_23 = arith.constant 0 : index
      %32 = vector.load %arg7[%c0_22, %c0_23] : memref<8x256xf32, #tpu.memory_space<vmem>>, vector<8x256xf32>
      tpu.vector_store %arg7[%c0_22, %c0_23], %31 {strides = array<i32>} : memref<8x256xf32, #tpu.memory_space<vmem>>, vector<8x256xf32>,
    } else {
    }
    return
  }
  func.func @transform_0(%arg0: i32, %arg1: i32, %arg2: i32) -> i32 {
    %c0_i32 = arith.constant 0 : i32
    %c0_i32_0 = arith.constant 0 : i32
    return %c0_i32 : i32
  }
  func.func @transform_1(%arg0: i32, %arg1: i32, %arg2: i32) -> (i32, i32) {
    %c0_i32 = arith.constant 0 : i32
    return %arg0, %arg2 : i32, i32
  }
  func.func @transform_2(%arg0: i32, %arg1: i32, %arg2: i32) -> (i32, i32) {
    %c0_i32 = arith.constant 0 : i32
    return %arg2, %arg1 : i32, i32
  }
  func.func @transform_3(%arg0: i32, %arg1: i32, %arg2: i32) -> (i32, i32) {
    %c0_i32 = arith.constant 0 : i32
    %c0_i32_0 = arith.constant 0 : i32
    return %c0_i32, %arg1 : i32, i32
  }
  func.func @transform_4(%arg0: i32, %arg1: i32, %arg2: i32) -> (i32, i32) {
    %c0_i32 = arith.constant 0 : i32
    return %arg0, %arg1 : i32, i32
  }
}

</mosaic_0001>

<llo_original>
// kernel: tpu_custom_call.1
$region0: #{tpu_custom_call.1}
  #allocation0 [shape = 'u32[]', space=smem, size = 0x4, offset = 0x4, fixed_abs, tag = 'smem constant byte address 0x4 - core index']
  #allocation1 [shape = 'u32[144,128]{1,0:T(1,128)}', space=vmem, size = 0x12000, scoped, tag = 'internal scratch']
  #allocation2 [shape = 'f32[8,256]{1,0:T(8,128)}', space=vmem, size = 0x2000, scoped, tag = 'scratch operand']
  #allocation3 [shape = 'f32[8,1]{1,0:T(8,128)}', space=vmem, size = 0x1000, scoped, tag = 'scratch operand']
  %s0 = inlined_call_operand.hbm [shape: f32[2], index: 0, kind: input, shape index: {}]
  %s1 = inlined_call_operand.hbm [shape: bf16[8,512], index: 1, kind: input, shape index: {}]
  %s2 = inlined_call_operand.hbm [shape: s8[512,256], index: 2, kind: input, shape index: {}]
  %s3 = inlined_call_operand.vmem [shape: f32[1,256], index: 3, kind: input, shape index: {}]
  %s4 = inlined_call_operand.hbm [shape: f32[8,256], index: 4, kind: output, shape index: {}]
  %s5 = sld [smem:[#allocation0]]
  $region46: #{tpu_custom_call.1} parent=0
    _
  %s7 = ssub.s32 1, %s5
  %s8 = scalar_select 0, %s7, %s5
  $region1: #{tpu_custom_call.1} parent=0
    #allocation4 [shape = 'u8[512]{0}', space=smem, size = 0x200, scoped, tag = 'input window, operand 0, single buffered']
    #allocation5 [shape = 's32[1]{0}', space=sflag, size = 0x4, scoped, tag = 'scoped memory for tpu_custom_call.1']
    #allocation6 [shape = 's32[1]{0}', space=sflag, size = 0x4, scoped, tag = 'scoped memory for tpu_custom_call.1']
    #allocation7 [shape = 's32[1]{0}', space=sflag, size = 0x4, scoped, tag = 'scoped memory for tpu_custom_call.1']
    #allocation8 [shape = 'u8[8192]{0}', space=vmem, size = 0x2000, scoped, tag = 'input window, operand 1, single buffered']
    #allocation9 [shape = 'u8[131072]{0}', space=vmem, size = 0x20000, scoped, tag = 'input window, operand 2, single buffered']
    #allocation10 [shape = 's32[1]{0}', space=sflag, size = 0x4, scoped, tag = 'scoped memory for tpu_custom_call.1']
    #allocation11 [shape = 'u8[8192]{0}', space=vmem, size = 0x2000, scoped, tag = 'output window, operand 0, single buffered']
    %9 = vsyncpa [#allocation7], 0
    %10 = vsyncpa [#allocation5], 0
    %11 = vsyncpa [#allocation10], 0
    %12 = vsyncpa [#allocation6], 0
    // Predicated region
    $region2: #{tpu_custom_call.1} parent=1 // pred_check
      _
    $region3: #{tpu_custom_call.1} parent=1 // pred_check_branch
      %14 = sbr.rel (0) target = $region5
    $region4: #{tpu_custom_call.1} parent=1 // pred_region
      %s16 = ssub.s32 16, 16
      %17 = vsyncadd [#allocation7], %s16
      %20 = dma.hbm_to_smem %s0, 16, [#allocation4], [#allocation7]
    $region5: #{tpu_custom_call.1} parent=1 // pred_fallthru
      _
    // Predicated region
    $region6: #{tpu_custom_call.1} parent=1 // pred_check
      _
    $region7: #{tpu_custom_call.1} parent=1 // pred_check_branch
      %22 = sbr.rel (0) target = $region9
    $region8: #{tpu_custom_call.1} parent=1 // pred_region
      %s24 = ssub.s32 256, 256
      %25 = vsyncadd [#allocation5], %s24
      %s27 = sshll.u32 [#allocation8], 4
      %s28 = int_to_ptr.vmem [resolvable:$true] %s27
      %30 = dma.hbm_to_vmem [thread:$0]  %s1, 256, %s28, [#allocation5]
    $region9: #{tpu_custom_call.1} parent=1 // pred_fallthru
      _
    // Predicated region
    $region10: #{tpu_custom_call.1} parent=1 // pred_check
      _
    $region11: #{tpu_custom_call.1} parent=1 // pred_check_branch
      %32 = sbr.rel (0) target = $region13
    $region12: #{tpu_custom_call.1} parent=1 // pred_region
      %s34 = ssub.s32 4096, 4096
      %35 = vsyncadd [#allocation10], %s34
      %s36 = sshll.u32 [#allocation9], 4
      %s37 = int_to_ptr.vmem [resolvable:$true] %s36
      %42 = dma.hbm_to_vmem [thread:$0]  %s2, 4096, %s37, [#allocation10], 256, 256, 16
    $region13: #{tpu_custom_call.1} parent=1 // pred_fallthru
      _
    // Predicated region
    $region14: #{tpu_custom_call.1} parent=1 // pred_check
      _
    $region15: #{tpu_custom_call.1} parent=1 // pred_check_branch
      %44 = sbr.rel (0) target = $region17
    $region16: #{tpu_custom_call.1} parent=1 // pred_region
      _
    $region17: #{tpu_custom_call.1} parent=1 // pred_fallthru
      _
    // Predicated region
    $region18: #{tpu_custom_call.1} parent=1 // pred_check
      _
    $region19: #{tpu_custom_call.1} parent=1 // pred_check_branch
      %46 = sbr.rel (0) target = $region21
    $region20: #{tpu_custom_call.1} parent=1 // pred_region
      %47 = dma.done [#allocation7], 16
    $region21: #{tpu_custom_call.1} parent=1 // pred_fallthru
      _
    // Predicated region
    $region22: #{tpu_custom_call.1} parent=1 // pred_check
      _
    $region23: #{tpu_custom_call.1} parent=1 // pred_check_branch
      %49 = sbr.rel (0) target = $region25
    $region24: #{tpu_custom_call.1} parent=1 // pred_region
      %50 = dma.done [#allocation5], 256
    $region25: #{tpu_custom_call.1} parent=1 // pred_fallthru
      _
    // Predicated region
    $region26: #{tpu_custom_call.1} parent=1 // pred_check
      _
    $region27: #{tpu_custom_call.1} parent=1 // pred_check_branch
      %52 = sbr.rel (0) target = $region29
    $region28: #{tpu_custom_call.1} parent=1 // pred_region
      %53 = dma.done [#allocation10], 4096
    $region29: #{tpu_custom_call.1} parent=1 // pred_fallthru
      _
    %54 = sfence
    %p55 = scmp.eq.s32.totalorder 0, 0
    // Predicated region
    $region30: #{tpu_custom_call.1} parent=1 // pred_check
      %p56 = pneg %p55
    $region31: #{tpu_custom_call.1} parent=1 // pred_check_branch
      %58 = sbr.rel (%p56) target = $region33
    $region32: #{tpu_custom_call.1} parent=1 // pred_region
      %59 = vst [vmem:[#allocation2] sm:$0xff] 0.0
      %60 = vst [vmem:[#allocation2 + $0x8] sm:$0xff] 0.0
      %vm61 = vcmask 7168
      %62 = vst.msk [vmem:[#allocation3] sm:$0xff] %vm61, 0.0
    $region33: #{tpu_custom_call.1} parent=1 // pred_fallthru
      _
    %v63 = vld [vmem:[#allocation8] sm:$0xff]
    %v64 = vld [vmem:[#allocation8 + $0x8] sm:$0xff]
    %v65 = vld [vmem:[#allocation9] sm:$0xff]
    %v66 = vld [vmem:[#allocation9 + $0x8] sm:$0xff]
    %v67 = vld [vmem:[#allocation9 + $0x10] sm:$0xff]
    %v68 = vld [vmem:[#allocation9 + $0x18] sm:$0xff]
    %v69 = vld [vmem:[#allocation9 + $0x20] sm:$0xff]
    %v70 = vld [vmem:[#allocation9 + $0x28] sm:$0xff]
    %v71 = vld [vmem:[#allocation9 + $0x30] sm:$0xff]
    %v72 = vld [vmem:[#allocation9 + $0x38] sm:$0xff]
    %v73 = vld [vmem:[#allocation9 + $0x40] sm:$0xff]
    %v74 = vld [vmem:[#allocation9 + $0x48] sm:$0xff]
    %v75 = vld [vmem:[#allocation9 + $0x50] sm:$0xff]
    %v76 = vld [vmem:[#allocation9 + $0x58] sm:$0xff]
    %v77 = vld [vmem:[#allocation9 + $0x60] sm:$0xff]
    %v78 = vld [vmem:[#allocation9 + $0x68] sm:$0xff]
    %v79 = vld [vmem:[#allocation9 + $0x70] sm:$0xff]
    %v80 = vld [vmem:[#allocation9 + $0x78] sm:$0xff]
    %v81 = vld [vmem:[#allocation9 + $0x80] sm:$0xff]
    %v82 = vld [vmem:[#allocation9 + $0x88] sm:$0xff]
    %v83 = vld [vmem:[#allocation9 + $0x90] sm:$0xff]
    %v84 = vld [vmem:[#allocation9 + $0x98] sm:$0xff]
    %v85 = vld [vmem:[#allocation9 + $0xa0] sm:$0xff]
    %v86 = vld [vmem:[#allocation9 + $0xa8] sm:$0xff]
    %v87 = vld [vmem:[#allocation9 + $0xb0] sm:$0xff]
    %v88 = vld [vmem:[#allocation9 + $0xb8] sm:$0xff]
    %v89 = vld [vmem:[#allocation9 + $0xc0] sm:$0xff]
    %v90 = vld [vmem:[#allocation9 + $0xc8] sm:$0xff]
    %v91 = vld [vmem:[#allocation9 + $0xd0] sm:$0xff]
    %v92 = vld [vmem:[#allocation9 + $0xd8] sm:$0xff]
    %v93 = vld [vmem:[#allocation9 + $0xe0] sm:$0xff]
    %v94 = vld [vmem:[#allocation9 + $0xe8] sm:$0xff]
    %v95 = vld [vmem:[#allocation9 + $0xf0] sm:$0xff]
    %v96 = vld [vmem:[#allocation9 + $0xf8] sm:$0xff]
    %v97 = vunpack.c.l.s8.bf16 %v65
    %v98 = vunpack.c.l.s8.bf16 %v66
    %v99 = vunpack.c.h.s8.bf16 %v65
    %v100 = vunpack.c.h.s8.bf16 %v66
    %v101 = vunpack.c.l.s8.bf16 %v67
    %v102 = vunpack.c.l.s8.bf16 %v68
    %v103 = vunpack.c.h.s8.bf16 %v67
    %v104 = vunpack.c.h.s8.bf16 %v68
    %v105 = vunpack.c.l.s8.bf16 %v69
    %v106 = vunpack.c.l.s8.bf16 %v70
    %v107 = vunpack.c.h.s8.bf16 %v69
    %v108 = vunpack.c.h.s8.bf16 %v70
    %v109 = vunpack.c.l.s8.bf16 %v71
    %v110 = vunpack.c.l.s8.bf16 %v72
    %v111 = vunpack.c.h.s8.bf16 %v71
    %v112 = vunpack.c.h.s8.bf16 %v72
    %v113 = vunpack.c.l.s8.bf16 %v73
    %v114 = vunpack.c.l.s8.bf16 %v74
    %v115 = vunpack.c.h.s8.bf16 %v73
    %v116 = vunpack.c.h.s8.bf16 %v74
    %v117 = vunpack.c.l.s8.bf16 %v75
    %v118 = vunpack.c.l.s8.bf16 %v76
    %v119 = vunpack.c.h.s8.bf16 %v75
    %v120 = vunpack.c.h.s8.bf16 %v76
    %v121 = vunpack.c.l.s8.bf16 %v77
    %v122 = vunpack.c.l.s8.bf16 %v78
    %v123 = vunpack.c.h.s8.bf16 %v77
    %v124 = vunpack.c.h.s8.bf16 %v78
    %v125 = vunpack.c.l.s8.bf16 %v79
    %v126 = vunpack.c.l.s8.bf16 %v80
    %v127 = vunpack.c.h.s8.bf16 %v79
    %v128 = vunpack.c.h.s8.bf16 %v80
    %v129 = vunpack.c.l.s8.bf16 %v81
    %v130 = vunpack.c.l.s8.bf16 %v82
    %v131 = vunpack.c.h.s8.bf16 %v81
    %v132 = vunpack.c.h.s8.bf16 %v82
    %v133 = vunpack.c.l.s8.bf16 %v83
    %v134 = vunpack.c.l.s8.bf16 %v84
    %v135 = vunpack.c.h.s8.bf16 %v83
    %v136 = vunpack.c.h.s8.bf16 %v84
    %v137 = vunpack.c.l.s8.bf16 %v85
    %v138 = vunpack.c.l.s8.bf16 %v86
    %v139 = vunpack.c.h.s8.bf16 %v85
    %v140 = vunpack.c.h.s8.bf16 %v86
    %v141 = vunpack.c.l.s8.bf16 %v87
    %v142 = vunpack.c.l.s8.bf16 %v88
    %v143 = vunpack.c.h.s8.bf16 %v87
    %v144 = vunpack.c.h.s8.bf16 %v88
    %v145 = vunpack.c.l.s8.bf16 %v89
    %v146 = vunpack.c.l.s8.bf16 %v90
    %v147 = vunpack.c.h.s8.bf16 %v89
    %v148 = vunpack.c.h.s8.bf16 %v90
    %v149 = vunpack.c.l.s8.bf16 %v91
    %v150 = vunpack.c.l.s8.bf16 %v92
    %v151 = vunpack.c.h.s8.bf16 %v91
    %v152 = vunpack.c.h.s8.bf16 %v92
    %v153 = vunpack.c.l.s8.bf16 %v93
    %v154 = vunpack.c.l.s8.bf16 %v94
    %v155 = vunpack.c.h.s8.bf16 %v93
    %v156 = vunpack.c.h.s8.bf16 %v94
    %v157 = vunpack.c.l.s8.bf16 %v95
    %v158 = vunpack.c.l.s8.bf16 %v96
    %v159 = vunpack.c.h.s8.bf16 %v95
    %v160 = vunpack.c.h.s8.bf16 %v96
    %v161 = vld [vmem:[#allocation2] sm:$0xff]
    %v162 = vld [vmem:[#allocation2 + $0x8] sm:$0xff]
    %v165 = vunpack.c.l.b16 %v63
    %v166 = vunpack.c.h.b16 %v63
    %v167 = vunpack.c.l.b16 %v64
    %v168 = vunpack.c.h.b16 %v64
    %v169 = vpack.c.b16 %v165, %v165
    %v170 = vpack.c.b16 %v166, %v166
    %v171 = vpack.c.b16 %v167, %v167
    %v172 = vpack.c.b16 %v168, %v168
    %177 = vmatprep.subr.bf16.mxu0 %v112
    %178 = vmatpush1.bf16.msra.mxu0 %v111
    %179 = vmatprep.subr.bf16.mxu0 %v110
    %180 = vmatpush1.bf16.msra.mxu0 %v109
    %181 = vmatprep.subr.bf16.mxu0 %v108
    %182 = vmatpush1.bf16.msra.mxu0 %v107
    %183 = vmatprep.subr.bf16.mxu0 %v106
    %184 = vmatpush1.bf16.msra.mxu0 %v105
    %185 = vmatprep.subr.bf16.mxu0 %v104
    %186 = vmatpush1.bf16.msra.mxu0 %v103
    %187 = vmatprep.subr.bf16.mxu0 %v102
    %188 = vmatpush1.bf16.msra.mxu0 %v101
    %189 = vmatprep.subr.bf16.mxu0 %v100
    %190 = vmatpush1.bf16.msra.mxu0 %v99
    %191 = vmatprep.subr.bf16.mxu0 %v98
    %192 = vmatpush1.bf16.msra.mxu0 %v97
    %193 = vmatprep.subr.bf16.mxu0 %v128
    %194 = vmatpush2.bf16.msra.mxu0 %v127
    %195 = vmatprep.subr.bf16.mxu0 %v126
    %196 = vmatpush2.bf16.msra.mxu0 %v125
    %197 = vmatprep.subr.bf16.mxu0 %v124
    %198 = vmatpush2.bf16.msra.mxu0 %v123
    %199 = vmatprep.subr.bf16.mxu0 %v122
    %200 = vmatpush2.bf16.msra.mxu0 %v121
    %201 = vmatprep.subr.bf16.mxu0 %v120
    %202 = vmatpush2.bf16.msra.mxu0 %v119
    %203 = vmatprep.subr.bf16.mxu0 %v118
    %204 = vmatpush2.bf16.msra.mxu0 %v117
    %205 = vmatprep.subr.bf16.mxu0 %v116
    %206 = vmatpush2.bf16.msra.mxu0 %v115
    %207 = vmatprep.subr.bf16.mxu0 %v114
    %208 = vmatpush2.bf16.msra.mxu0 %v113
    %209 = vmatprep.mubr.bf16.mxu0 %v170
    %210 = vmatmul.mubr.bf16.gmra.mxu0 %v169
    %v211 = vpop.f32.mrf.mxu0
    %v212 = vadd.f32 0.0, %v211
    %v213 = vpop.f32.mrf.mxu0
    %v214 = vadd.f32 0.0, %v213
    %v215 = vpop.f32.mrf.mxu0
    %v216 = vpop.f32.mrf.mxu0
    %217 = vdwg.mxu0
    %218 = vmatprep.subr.bf16.mxu0 %v144
    %219 = vmatpush1.bf16.msra.mxu0 %v143
    %220 = vmatprep.subr.bf16.mxu0 %v142
    %221 = vmatpush1.bf16.msra.mxu0 %v141
    %222 = vmatprep.subr.bf16.mxu0 %v140
    %223 = vmatpush1.bf16.msra.mxu0 %v139
    %224 = vmatprep.subr.bf16.mxu0 %v138
    %225 = vmatpush1.bf16.msra.mxu0 %v137
    %226 = vmatprep.subr.bf16.mxu0 %v136
    %227 = vmatpush1.bf16.msra.mxu0 %v135
    %228 = vmatprep.subr.bf16.mxu0 %v134
    %229 = vmatpush1.bf16.msra.mxu0 %v133
    %230 = vmatprep.subr.bf16.mxu0 %v132
    %231 = vmatpush1.bf16.msra.mxu0 %v131
    %232 = vmatprep.subr.bf16.mxu0 %v130
    %233 = vmatpush1.bf16.msra.mxu0 %v129
    %234 = vmatprep.subr.bf16.mxu0 %v160
    %235 = vmatpush2.bf16.msra.mxu0 %v159
    %236 = vmatprep.subr.bf16.mxu0 %v158
    %237 = vmatpush2.bf16.msra.mxu0 %v157
    %238 = vmatprep.subr.bf16.mxu0 %v156
    %239 = vmatpush2.bf16.msra.mxu0 %v155
    %240 = vmatprep.subr.bf16.mxu0 %v154
    %241 = vmatpush2.bf16.msra.mxu0 %v153
    %242 = vmatprep.subr.bf16.mxu0 %v152
    %243 = vmatpush2.bf16.msra.mxu0 %v151
    %244 = vmatprep.subr.bf16.mxu0 %v150
    %245 = vmatpush2.bf16.msra.mxu0 %v149
    %246 = vmatprep.subr.bf16.mxu0 %v148
    %247 = vmatpush2.bf16.msra.mxu0 %v147
    %248 = vmatprep.subr.bf16.mxu0 %v146
    %249 = vmatpush2.bf16.msra.mxu0 %v145
    %250 = vmatprep.mubr.bf16.mxu0 %v172
    %251 = vmatmul.mubr.bf16.gmra.mxu0 %v171
    %v252 = vpop.f32.mrf.mxu0
    %v253 = vadd.f32 %v212, %v252
    %v254 = vpop.f32.mrf.mxu0
    %v255 = vadd.f32 %v214, %v254
    %v256 = vpop.f32.mrf.mxu0
    %v257 = vpop.f32.mrf.mxu0
    %258 = vdwg.mxu0
    %v259 = vadd.f32 %v161, %v253
    %v260 = vadd.f32 %v162, %v255
    %261 = vst [vmem:[#allocation2] sm:$0xff] %v259
    %262 = vst [vmem:[#allocation2 + $0x8] sm:$0xff] %v260
    %v263 = vld [vmem:[#allocation3] sm:$0xff]
    %v264 = vunpack.c.l.bf16 %v63
    %v265 = vunpack.c.h.bf16 %v63
    %v266 = vunpack.c.l.bf16 %v64
    %v267 = vunpack.c.h.bf16 %v64
    %v268 = vadd.f32 %v264, %v265
    %v269 = vadd.f32 %v268, %v266
    %v270 = vadd.f32 %v269, %v267
    %271 = vadd.xlane.f32.xlu0 %v270
    %v272 = vpop.xlane.xlu0 %271
    %v273 = vadd.f32 %v263, %v272
    %vm274 = vcmask 7168
    %275 = vst.msk [vmem:[#allocation3] sm:$0xff] %vm274, %v273
    // Predicated region
    $region34: #{tpu_custom_call.1} parent=1 // pred_check
      %p276 = pneg %p55
    $region35: #{tpu_custom_call.1} parent=1 // pred_check_branch
      %278 = sbr.rel (%p276) target = $region37
    $region36: #{tpu_custom_call.1} parent=1 // pred_region
      %s279 = sld [smem:[#allocation4]]
      %s280 = sld [smem:[#allocation4 + $0x1]]
      %v281 = vld [vmem:[#allocation2] sm:$0xff]
      %v282 = vld [vmem:[#allocation2 + $0x8] sm:$0xff]
      %v283 = vstv %s279
      %v284 = vmul.f32 %v283, %v281
      %v285 = vmul.f32 %v283, %v282
      %v286 = vld [vmem:[#allocation3] sm:$0xff]
      %v287 = vstv %s280
      %v288 = vmul.f32 %v287, %v286
      %290 = vset.pattern.permute.xlu0 0
      %291 = vperm.xlu0 %290, %v288
      %v292 = vpop.permute.xlu0 %291
      %v294 = vsub.f32 %v284, %v292
      %v295 = vsub.f32 %v285, %v292
      %v296 = vld [vmem:[%s3] sm:$0x3]
      %v298 = vlaneseq
      %v299 = vshrl.u32 %v298, 7
      %v300 = vsub.s32 0, %v299
      %v301 = vrot.slane %v296, %v300
      %v302 = vlaneseq
      %v303 = vshrl.u32 %v302, 7
      %v304 = vsub.s32 1, %v303
      %v305 = vrot.slane %v296, %v304
      %v308 = vadd.f32 %v294, %v301
      %v309 = vadd.f32 %v295, %v305
      %310 = vst [vmem:[#allocation11] sm:$0xff] %v308
      %311 = vst [vmem:[#allocation11 + $0x8] sm:$0xff] %v309
    $region37: #{tpu_custom_call.1} parent=1 // pred_fallthru
      _
    // Predicated region
    $region38: #{tpu_custom_call.1} parent=1 // pred_check
      _
    $region39: #{tpu_custom_call.1} parent=1 // pred_check_branch
      %313 = sbr.rel (0) target = $region41
    $region40: #{tpu_custom_call.1} parent=1 // pred_region
      %s315 = ssub.s32 256, 256
      %316 = vsyncadd [#allocation6], %s315
      %s318 = sshll.u32 [#allocation11], 4
      %s319 = int_to_ptr.vmem [resolvable:$true] %s318
      %321 = dma.vmem_to_hbm [thread:$0]  %s319, 256, %s4, [#allocation6]
    $region41: #{tpu_custom_call.1} parent=1 // pred_fallthru
      _
    // Predicated region
    $region42: #{tpu_custom_call.1} parent=1 // pred_check
      _
    $region43: #{tpu_custom_call.1} parent=1 // pred_check_branch
      %323 = sbr.rel (0) target = $region45
    $region44: #{tpu_custom_call.1} parent=1 // pred_region
      %324 = dma.done [#allocation6], 256
    $region45: #{tpu_custom_call.1} parent=1 // pred_fallthru
      _
    %325 = vsyncpa [#allocation5], 1
    %326 = vsyncpa [#allocation10], 1
    %327 = vsyncpa [#allocation6], 1
    %328 = vsyncpa [#allocation7], 1

</llo_original>
